<compile_context>
chip_gen: v6e
topology: v6e:2x2x1
jax: 0.10.0
libtpu: 0.0.40
codegen_flags: <defaults>
</compile_context>

<pallas_src>
import functools

import jax
import jax.numpy as jnp
from jax.experimental import pallas as pl
from jax.experimental.pallas import tpu as pltpu


def _round_up(n, m):
    return ((n + m - 1) // m) * m


def _sublane_for(dtype):
    # packed sublane tile: f32 -> 8, bf16/f16 -> 16, int8/fp8 -> 32
    return {4: 8, 2: 16, 1: 32}.get(jnp.dtype(dtype).itemsize, 8)


def _vmem_capacity_bytes():
    try:
        return int(pltpu.get_tpu_info().vmem_capacity_bytes)
    except Exception:
        return 64 << 20  # conservative (v7x per-TC VMEM)


# --------------------------------------------------------------------------
# Once-per-model weight preparation (hoisted out of the per-call path).
# --------------------------------------------------------------------------
def prepare_adapter_params(w_down, b_down, w_up, b_up, *, compute_dtype=None):
    """PyTorch nn.Linear convention: w_down [down, size], w_up [up, down],
    up must equal size.  Returns (wd, bd, wu, bu) laid out [in, out] with the
    hidden dim zero-padded to a multiple of 128 (mathematically transparent:
    padded lanes see relu(0 + 0) = 0 and all-zero wu rows)."""
    down, size = w_down.shape
    up, down2 = w_up.shape
    assert down2 == down and up == size, "residual add requires up_sample == size"
    if compute_dtype is None:
        compute_dtype = w_down.dtype
    down_p = _round_up(down, 128)
    wd = jnp.pad(w_down, ((0, down_p - down), (0, 0))).T.astype(compute_dtype)  # [size, down_p]
    wu = jnp.pad(w_up, ((0, 0), (0, down_p - down))).T.astype(compute_dtype)    # [down_p, size]
    bd = jnp.pad(b_down, (0, down_p - down)).reshape(1, down_p).astype(jnp.float32)
    bu = b_up.reshape(1, size).astype(jnp.float32)
    return wd, bd, wu, bu


# --------------------------------------------------------------------------
# Kernel
# --------------------------------------------------------------------------
def _adapter_kernel(x_ref, wd_ref, bd_ref, wu_ref, bu_ref, o_ref):
    # x_ref:  [TM, size]        (native dtype, fed straight to the MXU)
    # wd_ref: [size, down_p]    bd_ref: [1, down_p]  (f32)
    # wu_ref: [down_p, size]    bu_ref: [1, size]    (f32)
    x = x_ref[...]

    # down projection (MXU, f32 accumulation) + bias + ReLU in f32
    h = jnp.dot(x, wd_ref[...], preferred_element_type=jnp.float32)
    h = jnp.maximum(h + bd_ref[...], 0.0)

    # up projection (cast h back to MXU-native dtype) + bias
    up = jnp.dot(h.astype(wu_ref.dtype), wu_ref[...],
                 preferred_element_type=jnp.float32)
    up = up + bu_ref[...]

    # residual add in the activation dtype: no extra f32 copy of the x tile
    o_ref[...] = (x + up.astype(x.dtype)).astype(o_ref.dtype)


# --------------------------------------------------------------------------
# Per-call apply (takes the pre-prepared weights).
# --------------------------------------------------------------------------
@functools.partial(jax.jit, static_argnames=("tm",))
def adapter_apply(x, wd, bd, wu, bu, *, tm=None):
    size = x.shape[-1]
    down_p = wd.shape[1]
    assert wd.shape[0] == size and wu.shape == (down_p, size)

    dtype = x.dtype
    dtype_bytes = jnp.dtype(dtype).itemsize
    sub = _sublane_for(dtype)

    x2d = x.reshape(-1, size)          # contiguous view -> no extra HBM pass
    n_rows = x2d.shape[0]

    size_v = _round_up(size, 128)      # VMEM lane footprint of one row

    # ---- generation-aware VMEM budgeting --------------------------------
    cap = _vmem_capacity_bytes()
    budget = int(cap * 0.55)           # headroom for compiler-internal temps

    w_bytes_elem = jnp.dtype(wd.dtype).itemsize
    wsub = _sublane_for(wd.dtype)
    weight_bytes_1 = ((_round_up(size, wsub) * down_p
                       + _round_up(down_p, wsub) * size_v) * w_bytes_elem
                      + (down_p + size_v) * 4)
    # Single-buffer constant-index weights only when they'd crowd out
    # activation tiles (big adapters); small weights keep the default.
    single_buf_weights = weight_bytes_1 >= (8 << 20)
    n_wbufs = 1 if single_buf_weights else 2
    weight_bytes = n_wbufs * weight_bytes_1

    # per-row VMEM: 2x in + 2x out tiles + f32 h / up temps
    per_row = 4 * size_v * dtype_bytes + (down_p + size_v) * 4

    if tm is None:
        avail = max(budget - weight_bytes, per_row * sub)
        tm_val = min(1024, max(sub, (avail // per_row) // sub * sub))
    else:
        tm_val = _round_up(int(tm), sub)
    tm_val = int(min(tm_val, _round_up(n_rows, sub)))

    need = (weight_bytes + 4 * tm_val * size_v * dtype_bytes
            + tm_val * (down_p + size_v) * 4)
    vmem_limit = int(min(cap, max(16 << 20, int(1.4 * need) + (4 << 20))))

    grid = (pl.cdiv(n_rows, tm_val),)

    def _wspec(shape):
        if single_buf_weights:
            return pl.BlockSpec(shape, lambda i: (0, 0),
                                pipeline_mode=pl.Buffered(1))
        return pl.BlockSpec(shape, lambda i: (0, 0))

    # honest (streamed-bytes) cost estimate
    flops = 2 * n_rows * size * down_p + 2 * n_rows * down_p * size
    bytes_accessed = (2 * n_rows * size * dtype_bytes                  # x + out
                      + (size * down_p + down_p * size) * w_bytes_elem  # weights
                      + (down_p + size) * 4)                            # biases

    out2d = pl.pallas_call(
        _adapter_kernel,
        out_shape=jax.ShapeDtypeStruct((n_rows, size), dtype),
        grid=grid,
        in_specs=[
            pl.BlockSpec((tm_val, size), lambda i: (i, 0)),   # x (streamed)
            _wspec((size, down_p)),                           # wd (resident)
            _wspec((1, down_p)),                              # bd
            _wspec((down_p, size)),                           # wu
            _wspec((1, size)),                                # bu
        ],
        out_specs=pl.BlockSpec((tm_val, size), lambda i: (i, 0)),
        compiler_params=pltpu.CompilerParams(
            dimension_semantics=("parallel",),
            vmem_limit_bytes=vmem_limit),
        cost_estimate=pl.CostEstimate(
            flops=flops, transcendentals=0, bytes_accessed=bytes_accessed),
    )(x2d, wd, bd, wu, bu)

    return out2d.reshape(x.shape)


def adapter_layer(x, w_down, b_down, w_up, b_up, *, tm=None):
    """Convenience one-shot wrapper (prefer preparing params once and calling
    adapter_apply directly in a real model)."""
    wd, bd, wu, bu = prepare_adapter_params(w_down, b_down, w_up, b_up,
                                            compute_dtype=x.dtype)
    return adapter_apply(x, wd, bd, wu, bu, tm=tm)


# --------------------------------------------------------------------------
# Test harness
# --------------------------------------------------------------------------
def _reference(x, w_down, b_down, w_up, b_up):
    h = jnp.maximum(x @ w_down.T + b_down, 0.0)
    return x + (h @ w_up.T + b_up)


def _run_case(key, B, S, size, down_sample, dtype=jnp.float32, tm=None):
    up_sample = size
    kx, kwd, kbd, kwu, kbu = jax.random.split(key, 5)
    x = jax.random.normal(kx, (B, S, size), dtype=dtype)
    w_down = jax.random.normal(kwd, (down_sample, size), dtype=dtype) * 0.1
    b_down = jax.random.normal(kbd, (down_sample,), dtype=dtype) * 0.1
    w_up = jax.random.normal(kwu, (up_sample, down_sample), dtype=dtype) * 0.1
    b_up = jax.random.normal(kbu, (up_sample,), dtype=dtype) * 0.1

    # weight prep hoisted (once per model); per-call path is adapter_apply
    wd, bd, wu, bu = prepare_adapter_params(w_down, b_down, w_up, b_up,
                                            compute_dtype=dtype)
    out = adapter_apply(x, wd, bd, wu, bu, tm=tm)
    out = jax.block_until_ready(out)

    ref = _reference(x, w_down, b_down, w_up, b_up)
    assert out.shape == (B, S, size)
    assert jnp.allclose(out, ref, atol=1e-4, rtol=1e-4), "mismatch vs reference"


if __name__ == "__main__":
    key = jax.random.PRNGKey(0)
    k1, k2 = jax.random.split(key)

    # Module config from the spec: AdapterLayer(size=32, down_sample=16, up_sample=32)
    _run_case(k1, B=2, S=8, size=32, down_sample=16)

    # Exercises row tiling with a ragged last tile (210 rows, TM=64) and
    # non-multiple-of-128 feature dims without any HBM-side padding.
    _run_case(k2, B=3, S=70, size=96, down_sample=40, tm=64)

    print("KERNEL_OK")
</pallas_src>

<mosaic_0001>
module attributes {stable_mosaic.version = 11 : i64} {
  func.func @_adapter_kernel(%arg0: i32, %arg1: memref<16x32xf32, #tpu.memory_space<vmem>>, %arg2: memref<32x128xf32, #tpu.memory_space<vmem>>, %arg3: memref<1x128xf32, #tpu.memory_space<vmem>>, %arg4: memref<128x32xf32, #tpu.memory_space<vmem>>, %arg5: memref<1x32xf32, #tpu.memory_space<vmem>>, %arg6: memref<16x32xf32, #tpu.memory_space<vmem>>) attributes {dimension_semantics = [#tpu.dimension_semantics<parallel>], iteration_bounds = array<i64: 1>, scalar_prefetch = 0 : i64, scratch_operands = 0 : i64, tpu.core_type = #tpu.core_type<tc>, window_params = [{transform_indices = @transform_0, window_bounds = array<i64: 16, 32>}, {pipeline_mode = #tpu.pipeline_mode<synchronous>, transform_indices = @transform_1, window_bounds = array<i64: 32, 128>}, {pipeline_mode = #tpu.pipeline_mode<synchronous>, transform_indices = @transform_2, window_bounds = array<i64: 1, 128>}, {pipeline_mode = #tpu.pipeline_mode<synchronous>, transform_indices = @transform_3, window_bounds = array<i64: 128, 32>}, {pipeline_mode = #tpu.pipeline_mode<synchronous>, transform_indices = @transform_4, window_bounds = array<i64: 1, 32>}, {transform_indices = @transform_5, window_bounds = array<i64: 16, 32>}]} {
    %c0 = arith.constant 0 : index
    %c0_0 = arith.constant 0 : index
    %0 = vector.load %arg1[%c0, %c0_0] : memref<16x32xf32, #tpu.memory_space<vmem>>, vector<16x32xf32>
    %c0_1 = arith.constant 0 : index
    %c0_2 = arith.constant 0 : index
    %1 = vector.load %arg2[%c0_1, %c0_2] : memref<32x128xf32, #tpu.memory_space<vmem>>, vector<32x128xf32>
    %cst = arith.constant dense<0.000000e+00> : vector<16x128xf32>
    %2 = tpu.matmul %0, %1, %cst {dimension_numbers = #tpu.dot_dimension_numbers<[1], [0], [0], [1], [0, 0, 1, 1], [], []>} : vector<16x32xf32>, vector<32x128xf32>, vector<16x128xf32> -> vector<16x128xf32>
    %c0_3 = arith.constant 0 : index
    %c0_4 = arith.constant 0 : index
    %3 = vector.load %arg3[%c0_3, %c0_4] : memref<1x128xf32, #tpu.memory_space<vmem>>, vector<1x128xf32>
    %4 = vector.broadcast %3 : vector<1x128xf32> to vector<16x128xf32>
    %5 = arith.addf %2, %4 : vector<16x128xf32>
    %cst_5 = arith.constant 0.000000e+00 : f32
    %6 = vector.broadcast %cst_5 : f32 to vector<16x128xf32>
    %7 = arith.maximumf %5, %6 : vector<16x128xf32>
    %c0_6 = arith.constant 0 : index
    %c0_7 = arith.constant 0 : index
    %8 = vector.load %arg4[%c0_6, %c0_7] : memref<128x32xf32, #tpu.memory_space<vmem>>, vector<128x32xf32>
    %cst_8 = arith.constant dense<0.000000e+00> : vector<16x32xf32>
    %9 = tpu.matmul %7, %8, %cst_8 {dimension_numbers = #tpu.dot_dimension_numbers<[1], [0], [0], [1], [0, 0, 1, 1], [], []>} : vector<16x128xf32>, vector<128x32xf32>, vector<16x32xf32> -> vector<16x32xf32>
    %c0_9 = arith.constant 0 : index
    %c0_10 = arith.constant 0 : index
    %10 = vector.load %arg5[%c0_9, %c0_10] : memref<1x32xf32, #tpu.memory_space<vmem>>, vector<1x32xf32>
    %11 = vector.broadcast %10 : vector<1x32xf32> to vector<16x32xf32>
    %12 = arith.addf %9, %11 : vector<16x32xf32>
    %13 = arith.addf %0, %12 : vector<16x32xf32>
    %c0_11 = arith.constant 0 : index
    %c0_12 = arith.constant 0 : index
    %14 = vector.load %arg6[%c0_11, %c0_12] : memref<16x32xf32, #tpu.memory_space<vmem>>, vector<16x32xf32>
    tpu.vector_store %arg6[%c0_11, %c0_12], %13 {strides = array<i32>} : memref<16x32xf32, #tpu.memory_space<vmem>>, vector<16x32xf32>,
    return
  }
  func.func @transform_0(%arg0: i32) -> (i32, i32) {
    %c0_i32 = arith.constant 0 : i32
    %c0_i32_0 = arith.constant 0 : i32
    return %arg0, %c0_i32 : i32, i32
  }
  func.func @transform_1(%arg0: i32) -> (i32, i32) {
    %c0_i32 = arith.constant 0 : i32
    %c0_i32_0 = arith.constant 0 : i32
    %c0_i32_1 = arith.constant 0 : i32
    return %c0_i32, %c0_i32_0 : i32, i32
  }
  func.func @transform_2(%arg0: i32) -> (i32, i32) {
    %c0_i32 = arith.constant 0 : i32
    %c0_i32_0 = arith.constant 0 : i32
    %c0_i32_1 = arith.constant 0 : i32
    return %c0_i32, %c0_i32_0 : i32, i32
  }
  func.func @transform_3(%arg0: i32) -> (i32, i32) {
    %c0_i32 = arith.constant 0 : i32
    %c0_i32_0 = arith.constant 0 : i32
    %c0_i32_1 = arith.constant 0 : i32
    return %c0_i32, %c0_i32_0 : i32, i32
  }
  func.func @transform_4(%arg0: i32) -> (i32, i32) {
    %c0_i32 = arith.constant 0 : i32
    %c0_i32_0 = arith.constant 0 : i32
    %c0_i32_1 = arith.constant 0 : i32
    return %c0_i32, %c0_i32_0 : i32, i32
  }
  func.func @transform_5(%arg0: i32) -> (i32, i32) {
    %c0_i32 = arith.constant 0 : i32
    %c0_i32_0 = arith.constant 0 : i32
    return %arg0, %c0_i32 : i32, i32
  }
}

</mosaic_0001>

<llo_original>
// kernel: adapter_apply.1
$region0: #{adapter_apply.1}
  #allocation0 [shape = 'u32[]', space=smem, size = 0x4, offset = 0x4, fixed_abs, tag = 'smem constant byte address 0x4 - core index']
  #allocation1 [shape = 'u32[144,128]{1,0:T(1,128)}', space=vmem, size = 0x12000, scoped, tag = 'internal scratch']
  %s0 = inlined_call_operand.vmem [shape: f32[16,32], index: 0, kind: input, shape index: {}]
  %s1 = inlined_call_operand.vmem [shape: f32[32,128], index: 1, kind: input, shape index: {}]
  %s2 = inlined_call_operand.vmem [shape: f32[1,128], index: 2, kind: input, shape index: {}]
  %s3 = inlined_call_operand.vmem [shape: f32[128,32], index: 3, kind: input, shape index: {}]
  %s4 = inlined_call_operand.vmem [shape: f32[1,32], index: 4, kind: input, shape index: {}]
  %s5 = inlined_call_operand.hbm [shape: f32[16,32], index: 5, kind: output, shape index: {}]
  %s6 = sld [smem:[#allocation0]]
  $region30: #{adapter_apply.1} parent=0
    _
  %s8 = ssub.s32 1, %s6
  %s9 = scalar_select 0, %s8, %s6
  $region1: #{adapter_apply.1} parent=0
    #allocation2 [shape = 'u8[8192]{0}', space=vmem, size = 0x2000, scoped, tag = 'output window, operand 0, single buffered']
    #allocation3 [shape = 's32[1]{0}', space=sflag, size = 0x4, scoped, tag = 'scoped memory for adapter_apply.1']
    %10 = vsyncpa [#allocation3], 0
    // Predicated region
    $region2: #{adapter_apply.1} parent=1 // pred_check
      _
    $region3: #{adapter_apply.1} parent=1 // pred_check_branch
      %12 = sbr.rel (0) target = $region5
    $region4: #{adapter_apply.1} parent=1 // pred_region
      _
    $region5: #{adapter_apply.1} parent=1 // pred_fallthru
      _
    // Predicated region
    $region6: #{adapter_apply.1} parent=1 // pred_check
      _
    $region7: #{adapter_apply.1} parent=1 // pred_check_branch
      %14 = sbr.rel (0) target = $region9
    $region8: #{adapter_apply.1} parent=1 // pred_region
      _
    $region9: #{adapter_apply.1} parent=1 // pred_fallthru
      _
    // Predicated region
    $region10: #{adapter_apply.1} parent=1 // pred_check
      _
    $region11: #{adapter_apply.1} parent=1 // pred_check_branch
      %16 = sbr.rel (0) target = $region13
    $region12: #{adapter_apply.1} parent=1 // pred_region
      _
    $region13: #{adapter_apply.1} parent=1 // pred_fallthru
      _
    // Predicated region
    $region14: #{adapter_apply.1} parent=1 // pred_check
      _
    $region15: #{adapter_apply.1} parent=1 // pred_check_branch
      %18 = sbr.rel (0) target = $region17
    $region16: #{adapter_apply.1} parent=1 // pred_region
      _
    $region17: #{adapter_apply.1} parent=1 // pred_fallthru
      _
    // Predicated region
    $region18: #{adapter_apply.1} parent=1 // pred_check
      _
    $region19: #{adapter_apply.1} parent=1 // pred_check_branch
      %20 = sbr.rel (0) target = $region21
    $region20: #{adapter_apply.1} parent=1 // pred_region
      _
    $region21: #{adapter_apply.1} parent=1 // pred_fallthru
      _
    %v21 = vld [vmem:[%s0] sm:$0xff]
    %v22 = vld [vmem:[%s0 + $0x8] sm:$0xff]
    %v23 = vld [vmem:[%s1] sm:$0xff]
    %v24 = vld [vmem:[%s1 + $0x8] sm:$0xff]
    %v25 = vld [vmem:[%s1 + $0x10] sm:$0xff]
    %v26 = vld [vmem:[%s1 + $0x18] sm:$0xff]
    %v27 = vld [vmem:[%s2] sm:$0x1]
    %v29 = vlaneseq
    %v30 = vshrl.u32 %v29, 7
    %v31 = vsub.s32 0, %v30
    %v32 = vrot.slane %v27, %v31
    %vm34 = vcmask 261120
    %v36 = vsel %vm34, %v21, 0
    %v39 = vsel %vm34, %v22, 0
    %41 = vmatprep.subr.mxu0 0.0
    %42 = vmatpush1.msra.mxu0 0.0
    %43 = vmatprep.subr.mxu0 0.0
    %44 = vmatpush1.msra.mxu0 0.0
    %45 = vmatprep.subr.mxu0 0.0
    %46 = vmatpush1.msra.mxu0 0.0
    %47 = vmatprep.subr.mxu0 0.0
    %48 = vmatpush1.msra.mxu0 0.0
    %49 = vmatprep.subr.mxu0 0.0
    %50 = vmatpush1.msra.mxu0 0.0
    %51 = vmatprep.subr.mxu0 0.0
    %52 = vmatpush1.msra.mxu0 0.0
    %53 = vmatprep.subr.mxu0 0.0
    %54 = vmatpush1.msra.mxu0 0.0
    %55 = vmatprep.subr.mxu0 0.0
    %56 = vmatpush1.msra.mxu0 0.0
    %57 = vmatprep.subr.mxu0 0.0
    %58 = vmatpush1.msra.mxu0 0.0
    %59 = vmatprep.subr.mxu0 0.0
    %60 = vmatpush1.msra.mxu0 0.0
    %61 = vmatprep.subr.mxu0 0.0
    %62 = vmatpush1.msra.mxu0 0.0
    %63 = vmatprep.subr.mxu0 0.0
    %64 = vmatpush1.msra.mxu0 0.0
    %65 = vmatprep.subr.mxu0 0.0
    %66 = vmatpush1.msra.mxu0 %v26
    %67 = vmatprep.subr.mxu0 0.0
    %68 = vmatpush1.msra.mxu0 %v25
    %69 = vmatprep.subr.mxu0 0.0
    %70 = vmatpush1.msra.mxu0 %v24
    %71 = vmatprep.subr.mxu0 0.0
    %72 = vmatpush1.msra.mxu0 %v23
    %73 = vmatprep.subr.mxu0 0.0
    %74 = vmatpush2.msra.mxu0 0.0
    %75 = vmatprep.subr.mxu0 0.0
    %76 = vmatpush2.msra.mxu0 0.0
    %77 = vmatprep.subr.mxu0 0.0
    %78 = vmatpush2.msra.mxu0 0.0
    %79 = vmatprep.subr.mxu0 0.0
    %80 = vmatpush2.msra.mxu0 0.0
    %81 = vmatprep.subr.mxu0 0.0
    %82 = vmatpush2.msra.mxu0 0.0
    %83 = vmatprep.subr.mxu0 0.0
    %84 = vmatpush2.msra.mxu0 0.0
    %85 = vmatprep.subr.mxu0 0.0
    %86 = vmatpush2.msra.mxu0 0.0
    %87 = vmatprep.subr.mxu0 0.0
    %88 = vmatpush2.msra.mxu0 0.0
    %89 = vmatprep.subr.mxu0 0.0
    %90 = vmatpush2.msra.mxu0 0.0
    %91 = vmatprep.subr.mxu0 0.0
    %92 = vmatpush2.msra.mxu0 0.0
    %93 = vmatprep.subr.mxu0 0.0
    %94 = vmatpush2.msra.mxu0 0.0
    %95 = vmatprep.subr.mxu0 0.0
    %96 = vmatpush2.msra.mxu0 0.0
    %97 = vmatprep.subr.mxu0 0.0
    %98 = vmatpush2.msra.mxu0 0.0
    %99 = vmatprep.subr.mxu0 0.0
    %100 = vmatpush2.msra.mxu0 0.0
    %101 = vmatprep.subr.mxu0 0.0
    %102 = vmatpush2.msra.mxu0 0.0
    %103 = vmatprep.subr.mxu0 0.0
    %104 = vmatpush2.msra.mxu0 0.0
    %105 = vmatprep.mubr.f32.mxu0 0.0
    %106 = vmatmul.mubr.f32.gmra.mxu0 %v36
    %v107 = vpop.f32.mrf.mxu0
    %v108 = vadd.f32 %v32, %v107
    %v109 = vpop.f32.mrf.mxu0
    %110 = vmatprep.mubr.f32.mxu0 0.0
    %111 = vmatmul.mubr.f32.gmra.mxu0 %v39
    %v112 = vpop.f32.mrf.mxu0
    %v113 = vadd.f32 %v32, %v112
    %v114 = vpop.f32.mrf.mxu0
    %115 = vdwg.mxu0
    %v116 = vmax.f32 %v108, 0.0
    %v117 = vmax.f32 %v113, 0.0
    %v118 = vld [vmem:[%s3] sm:$0xff]
    %v119 = vld [vmem:[%s3 + $0x8] sm:$0xff]
    %v120 = vld [vmem:[%s3 + $0x10] sm:$0xff]
    %v121 = vld [vmem:[%s3 + $0x18] sm:$0xff]
    %v122 = vld [vmem:[%s3 + $0x20] sm:$0xff]
    %v123 = vld [vmem:[%s3 + $0x28] sm:$0xff]
    %v124 = vld [vmem:[%s3 + $0x30] sm:$0xff]
    %v125 = vld [vmem:[%s3 + $0x38] sm:$0xff]
    %v126 = vld [vmem:[%s3 + $0x40] sm:$0xff]
    %v127 = vld [vmem:[%s3 + $0x48] sm:$0xff]
    %v128 = vld [vmem:[%s3 + $0x50] sm:$0xff]
    %v129 = vld [vmem:[%s3 + $0x58] sm:$0xff]
    %v130 = vld [vmem:[%s3 + $0x60] sm:$0xff]
    %v131 = vld [vmem:[%s3 + $0x68] sm:$0xff]
    %v132 = vld [vmem:[%s3 + $0x70] sm:$0xff]
    %v133 = vld [vmem:[%s3 + $0x78] sm:$0xff]
    %v134 = vld [vmem:[%s4] sm:$0x1]
    %v136 = vlaneseq
    %v137 = vshrl.u32 %v136, 7
    %v138 = vsub.s32 0, %v137
    %v139 = vrot.slane %v134, %v138
    %141 = vmatprep.subr.mxu0 0.0
    %142 = vmatpush1.msra.mxu0 %v133
    %143 = vmatprep.subr.mxu0 0.0
    %144 = vmatpush1.msra.mxu0 %v132
    %145 = vmatprep.subr.mxu0 0.0
    %146 = vmatpush1.msra.mxu0 %v131
    %147 = vmatprep.subr.mxu0 0.0
    %148 = vmatpush1.msra.mxu0 %v130
    %149 = vmatprep.subr.mxu0 0.0
    %150 = vmatpush1.msra.mxu0 %v129
    %151 = vmatprep.subr.mxu0 0.0
    %152 = vmatpush1.msra.mxu0 %v128
    %153 = vmatprep.subr.mxu0 0.0
    %154 = vmatpush1.msra.mxu0 %v127
    %155 = vmatprep.subr.mxu0 0.0
    %156 = vmatpush1.msra.mxu0 %v126
    %157 = vmatprep.subr.mxu0 0.0
    %158 = vmatpush1.msra.mxu0 %v125
    %159 = vmatprep.subr.mxu0 0.0
    %160 = vmatpush1.msra.mxu0 %v124
    %161 = vmatprep.subr.mxu0 0.0
    %162 = vmatpush1.msra.mxu0 %v123
    %163 = vmatprep.subr.mxu0 0.0
    %164 = vmatpush1.msra.mxu0 %v122
    %165 = vmatprep.subr.mxu0 0.0
    %166 = vmatpush1.msra.mxu0 %v121
    %167 = vmatprep.subr.mxu0 0.0
    %168 = vmatpush1.msra.mxu0 %v120
    %169 = vmatprep.subr.mxu0 0.0
    %170 = vmatpush1.msra.mxu0 %v119
    %171 = vmatprep.subr.mxu0 0.0
    %172 = vmatpush1.msra.mxu0 %v118
    %173 = vmatprep.subr.mxu0 0.0
    %174 = vmatpush2.msra.mxu0 0.0
    %175 = vmatprep.subr.mxu0 0.0
    %176 = vmatpush2.msra.mxu0 0.0
    %177 = vmatprep.subr.mxu0 0.0
    %178 = vmatpush2.msra.mxu0 0.0
    %179 = vmatprep.subr.mxu0 0.0
    %180 = vmatpush2.msra.mxu0 0.0
    %181 = vmatprep.subr.mxu0 0.0
    %182 = vmatpush2.msra.mxu0 0.0
    %183 = vmatprep.subr.mxu0 0.0
    %184 = vmatpush2.msra.mxu0 0.0
    %185 = vmatprep.subr.mxu0 0.0
    %186 = vmatpush2.msra.mxu0 0.0
    %187 = vmatprep.subr.mxu0 0.0
    %188 = vmatpush2.msra.mxu0 0.0
    %189 = vmatprep.subr.mxu0 0.0
    %190 = vmatpush2.msra.mxu0 0.0
    %191 = vmatprep.subr.mxu0 0.0
    %192 = vmatpush2.msra.mxu0 0.0
    %193 = vmatprep.subr.mxu0 0.0
    %194 = vmatpush2.msra.mxu0 0.0
    %195 = vmatprep.subr.mxu0 0.0
    %196 = vmatpush2.msra.mxu0 0.0
    %197 = vmatprep.subr.mxu0 0.0
    %198 = vmatpush2.msra.mxu0 0.0
    %199 = vmatprep.subr.mxu0 0.0
    %200 = vmatpush2.msra.mxu0 0.0
    %201 = vmatprep.subr.mxu0 0.0
    %202 = vmatpush2.msra.mxu0 0.0
    %203 = vmatprep.subr.mxu0 0.0
    %204 = vmatpush2.msra.mxu0 0.0
    %205 = vmatprep.mubr.f32.mxu0 0.0
    %206 = vmatmul.mubr.f32.gmra.mxu0 %v116
    %v207 = vpop.f32.mrf.mxu0
    %v208 = vadd.f32 %v139, %v207
    %v209 = vpop.f32.mrf.mxu0
    %210 = vmatprep.mubr.f32.mxu0 0.0
    %211 = vmatmul.mubr.f32.gmra.mxu0 %v117
    %v212 = vpop.f32.mrf.mxu0
    %v213 = vadd.f32 %v139, %v212
    %v214 = vpop.f32.mrf.mxu0
    %215 = vdwg.mxu0
    %v216 = vadd.f32 %v21, %v208
    %v217 = vadd.f32 %v22, %v213
    %218 = vst.msk [vmem:[#allocation2] sm:$0xff] %vm34, %v216
    %219 = vst.msk [vmem:[#allocation2 + $0x8] sm:$0xff] %vm34, %v217
    // Predicated region
    $region22: #{adapter_apply.1} parent=1 // pred_check
      _
    $region23: #{adapter_apply.1} parent=1 // pred_check_branch
      %221 = sbr.rel (0) target = $region25
    $region24: #{adapter_apply.1} parent=1 // pred_region
      %s223 = ssub.s32 256, 256
      %224 = vsyncadd [#allocation3], %s223
      %s225 = sshll.u32 [#allocation2], 4
      %s226 = int_to_ptr.vmem [resolvable:$true] %s225
      %231 = dma.vmem_to_hbm [thread:$0]  %s226, 256, %s5, [#allocation3], 128, 128, 8
    $region25: #{adapter_apply.1} parent=1 // pred_fallthru
      _
    // Predicated region
    $region26: #{adapter_apply.1} parent=1 // pred_check
      _
    $region27: #{adapter_apply.1} parent=1 // pred_check_branch
      %233 = sbr.rel (0) target = $region29
    $region28: #{adapter_apply.1} parent=1 // pred_region
      %234 = dma.done [#allocation3], 256
    $region29: #{adapter_apply.1} parent=1 // pred_fallthru
      _
    %235 = vsyncpa [#allocation3], 1

</llo_original>
